<compile_context>
chip_gen: v7x
topology: tpu7x:2x2x1
jax: 0.10.0
libtpu: 0.0.40
codegen_flags: <defaults>
</compile_context>

<pallas_src>
import functools
import math

import jax
import jax.numpy as jnp
from jax.experimental import pallas as pl
from jax.experimental.pallas import tpu as pltpu

_LANE = 128      # lane width / MXU alignment target
_SUBLANE = 8     # f32 sublane


def _round_up(n, m):
    return ((n + m - 1) // m) * m


def _mlp_kernel(params_ref, x_ref, out_ref, *, layer_meta):
    """Whole forward pass for one batch tile.

    params_ref : (R, P) packed f32 parameter slab (resident across grid steps).
    x_ref      : (block_b, in_padded)  lane-dense activation tile.
    out_ref    : (block_b, out_padded) lane-dense output tile.
    layer_meta : static tuple of (row_offset, k_padded, n_padded) per layer.
    """
    x = x_ref[...].astype(jnp.float32)                       # x = x.float()
    for li, (off, kp, np_) in enumerate(layer_meta):
        if li > 0:
            # leaky_relu with PyTorch default negative_slope = 0.01 (VPU)
            x = jnp.where(x > 0, x, jnp.float32(0.01) * x)
        w = params_ref[off:off + kp, :np_]                    # (kp, np_) static slice
        b = params_ref[off + kp:off + kp + 1, :np_]           # (1, np_) lane-dense bias row
        x = jnp.dot(x, w, preferred_element_type=jnp.float32) + b
    out_ref[...] = x.astype(out_ref.dtype)


def pack_params(params):
    """Pack [(W, b), ...] into one contiguous, 128-lane-aligned f32 buffer.

    W: (in, out)  (i.e. PyTorch weight transposed), b: (out,) or (1, out).
    Layout per layer: [ W zero-padded to (k_pad, P) ; bias block (8, P), row 0 = b ].
    Returns (packed, layer_meta) with static (row_offset, k_pad, n_pad) per layer.
    """
    dims = [params[0][0].shape[0]] + [w.shape[1] for w, _ in params]
    pdims = [_round_up(d, _LANE) for d in dims]
    P = max(pdims)

    segs, layer_meta, off = [], [], 0
    for i, (w, b) in enumerate(params):
        kp, np_ = pdims[i], pdims[i + 1]
        wp = jnp.zeros((kp, P), jnp.float32).at[: w.shape[0], : w.shape[1]].set(
            w.astype(jnp.float32))
        bp = jnp.zeros((_SUBLANE, P), jnp.float32).at[0, : w.shape[1]].set(
            jnp.reshape(b, (-1,)).astype(jnp.float32))
        segs.extend([wp, bp])
        layer_meta.append((off, kp, np_))
        off += kp + _SUBLANE
    packed = jnp.concatenate(segs, axis=0)
    return packed, tuple(layer_meta)


def nn_forward(x, params, *, block_b=128):
    """Forward pass. x: (batch, in_size); params: list of (W (in,out), b)."""
    batch, in_size = x.shape
    out_size = params[-1][0].shape[1]

    packed, layer_meta = pack_params(params)
    in_p = layer_meta[0][1]
    out_p = layer_meta[-1][2]
    R, P = packed.shape

    # Lane-dense, sublane-aligned activation slab: pad batch to the tile size
    # and features to 128 lanes (zero padding is exact for Linear+leaky_relu).
    bp = _round_up(max(batch, 1), block_b)
    xp = jnp.zeros((bp, in_p), jnp.float32).at[:batch, :in_size].set(
        x.astype(jnp.float32))

    grid = (bp // block_b,)

    out_padded = pl.pallas_call(
        functools.partial(_mlp_kernel, layer_meta=layer_meta),
        out_shape=jax.ShapeDtypeStruct((bp, out_p), jnp.float32),
        grid=grid,
        in_specs=[
            # Packed params: constant block index -> stays resident in VMEM.
            pl.BlockSpec((R, P), lambda i: (0, 0)),
            # Activation tiles marched over the (parallel) batch grid axis.
            pl.BlockSpec((block_b, in_p), lambda i: (i, 0)),
        ],
        out_specs=pl.BlockSpec((block_b, out_p), lambda i: (i, 0)),
        compiler_params=pltpu.CompilerParams(
            dimension_semantics=("parallel",)),
    )(packed, xp)

    return out_padded[:batch, :out_size]


def init_params(key, in_size, out_size, layers):
    """Deterministic init mirroring nn.Linear default U(-1/sqrt(fan_in), +)."""
    sizes = [in_size] + list(layers) + [out_size]
    params = []
    for i in range(len(sizes) - 1):
        fan_in, fan_out = sizes[i], sizes[i + 1]
        key, kw, kb = jax.random.split(key, 3)
        bound = 1.0 / math.sqrt(fan_in)
        # stored as (in, out) == PyTorch weight (out, in) transposed
        w = jax.random.uniform(kw, (fan_in, fan_out), jnp.float32, -bound, bound)
        b = jax.random.uniform(kb, (1, fan_out), jnp.float32, -bound, bound)
        params.append((w, b))
    return params


def nn_reference(x, params):
    x = x.astype(jnp.float32)
    for i, (w, b) in enumerate(params):
        if i > 0:
            x = jnp.where(x > 0, x, 0.01 * x)
        x = x @ w + jnp.reshape(b, (1, -1))
    return x


if __name__ == "__main__":
    key = jax.random.PRNGKey(0)
    k_x, k_p = jax.random.split(key)

    # Cartpole MLP: state dim 4 -> hidden 32 -> 2 actions.
    # Batch 256 = a typical DQN minibatch; amortizes launch/DMA overhead and
    # exercises the parallel batch grid (2 tiles of 128 rows).
    batch, in_size, out_size = 256, 4, 2
    hidden = [32]

    x = jax.random.normal(k_x, (batch, in_size), jnp.float32)
    params = init_params(k_p, in_size, out_size, hidden)

    out = jax.block_until_ready(nn_forward(x, params))

    ref = nn_reference(x, params)
    assert out.shape == (batch, out_size)
    assert jnp.allclose(out, ref, atol=1e-4, rtol=1e-5), "mismatch vs reference"

    print("KERNEL_OK")
</pallas_src>

<mosaic_0001>
module attributes {stable_mosaic.version = 11 : i64} {
  func.func @_mlp_kernel(%arg0: i32, %arg1: memref<272x128xf32, #tpu.memory_space<vmem>>, %arg2: memref<128x128xf32, #tpu.memory_space<vmem>>, %arg3: memref<128x128xf32, #tpu.memory_space<vmem>>) attributes {dimension_semantics = [#tpu.dimension_semantics<parallel>], iteration_bounds = array<i64: 2>, scalar_prefetch = 0 : i64, scratch_operands = 0 : i64, tpu.core_type = #tpu.core_type<tc>, window_params = [{pipeline_mode = #tpu.pipeline_mode<synchronous>, transform_indices = @transform_0, window_bounds = array<i64: 272, 128>}, {transform_indices = @transform_1, window_bounds = array<i64: 128, 128>}, {transform_indices = @transform_2, window_bounds = array<i64: 128, 128>}]} {
    %c0 = arith.constant 0 : index
    %c0_0 = arith.constant 0 : index
    %0 = vector.load %arg2[%c0, %c0_0] : memref<128x128xf32, #tpu.memory_space<vmem>>, vector<128x128xf32>
    %c0_1 = arith.constant 0 : index
    %c0_2 = arith.constant 0 : index
    %1 = vector.load %arg1[%c0_1, %c0_2] : memref<272x128xf32, #tpu.memory_space<vmem>>, vector<128x128xf32>
    %c128 = arith.constant 128 : index
    %c0_3 = arith.constant 0 : index
    %2 = vector.load %arg1[%c128, %c0_3] : memref<272x128xf32, #tpu.memory_space<vmem>>, vector<1x128xf32>
    %cst = arith.constant dense<0.000000e+00> : vector<128x128xf32>
    %3 = tpu.matmul %0, %1, %cst {dimension_numbers = #tpu.dot_dimension_numbers<[1], [0], [0], [1], [0, 0, 1, 1], [], []>} : vector<128x128xf32>, vector<128x128xf32>, vector<128x128xf32> -> vector<128x128xf32>
    %4 = vector.broadcast %2 : vector<1x128xf32> to vector<128x128xf32>
    %5 = arith.addf %3, %4 : vector<128x128xf32>
    %cst_4 = arith.constant 0.000000e+00 : f32
    %6 = vector.broadcast %cst_4 : f32 to vector<128x128xf32>
    %7 = arith.cmpf ogt, %5, %6 : vector<128x128xf32>
    %cst_5 = arith.constant 0.00999999977 : f32
    %8 = vector.broadcast %cst_5 : f32 to vector<128x128xf32>
    %9 = arith.mulf %8, %5 : vector<128x128xf32>
    %10 = arith.select %7, %5, %9 : vector<128x128xi1>, vector<128x128xf32>
    %c136 = arith.constant 136 : index
    %c0_6 = arith.constant 0 : index
    %11 = vector.load %arg1[%c136, %c0_6] : memref<272x128xf32, #tpu.memory_space<vmem>>, vector<128x128xf32>
    %c264 = arith.constant 264 : index
    %c0_7 = arith.constant 0 : index
    %12 = vector.load %arg1[%c264, %c0_7] : memref<272x128xf32, #tpu.memory_space<vmem>>, vector<1x128xf32>
    %cst_8 = arith.constant dense<0.000000e+00> : vector<128x128xf32>
    %13 = tpu.matmul %10, %11, %cst_8 {dimension_numbers = #tpu.dot_dimension_numbers<[1], [0], [0], [1], [0, 0, 1, 1], [], []>} : vector<128x128xf32>, vector<128x128xf32>, vector<128x128xf32> -> vector<128x128xf32>
    %14 = vector.broadcast %12 : vector<1x128xf32> to vector<128x128xf32>
    %15 = arith.addf %13, %14 : vector<128x128xf32>
    %c0_9 = arith.constant 0 : index
    %c0_10 = arith.constant 0 : index
    %16 = vector.load %arg3[%c0_9, %c0_10] : memref<128x128xf32, #tpu.memory_space<vmem>>, vector<128x128xf32>
    tpu.vector_store %arg3[%c0_9, %c0_10], %15 {strides = array<i32>} : memref<128x128xf32, #tpu.memory_space<vmem>>, vector<128x128xf32>,
    return
  }
  func.func @transform_0(%arg0: i32) -> (i32, i32) {
    %c0_i32 = arith.constant 0 : i32
    %c0_i32_0 = arith.constant 0 : i32
    %c0_i32_1 = arith.constant 0 : i32
    return %c0_i32, %c0_i32_0 : i32, i32
  }
  func.func @transform_1(%arg0: i32) -> (i32, i32) {
    %c0_i32 = arith.constant 0 : i32
    %c0_i32_0 = arith.constant 0 : i32
    return %arg0, %c0_i32 : i32, i32
  }
  func.func @transform_2(%arg0: i32) -> (i32, i32) {
    %c0_i32 = arith.constant 0 : i32
    %c0_i32_0 = arith.constant 0 : i32
    return %arg0, %c0_i32 : i32, i32
  }
}

</mosaic_0001>

<llo_original>
// kernel: tpu_custom_call.1
$region0: #{tpu_custom_call.1}
  #allocation0 [shape = 'u32[]', space=smem, size = 0x4, offset = 0x4, fixed_abs, tag = 'smem constant byte address 0x4 - core index']
  #allocation1 [shape = 'u32[144,128]{1,0:T(1,128)}', space=vmem, size = 0x12000, scoped, tag = 'internal scratch']
  %s0 = inlined_call_operand.hbm [shape: f32[272,128], index: 0, kind: input, shape index: {}]
  %s1 = inlined_call_operand.hbm [shape: f32[256,128], index: 1, kind: input, shape index: {}]
  %s2 = inlined_call_operand.hbm [shape: f32[256,128], index: 2, kind: output, shape index: {}]
  %s3 = sld [smem:[#allocation0]]
  $region49: #{tpu_custom_call.1} parent=0
    _
  %s5 = ssub.s32 1, %s3
  %s6 = scalar_select 0, %s5, %s3
  $region1: #{tpu_custom_call.1} parent=0
    #allocation2 [shape = 'u8[139264]{0}', space=vmem, size = 0x22000, scoped, tag = 'input window, operand 0, single buffered']
    #allocation3 [shape = 's32[2]{0}', space=sflag, size = 0x8, scoped, tag = 'scoped memory for tpu_custom_call.1']
    #allocation4 [shape = 's32[2]{0}', space=sflag, size = 0x8, scoped, tag = 'scoped memory for tpu_custom_call.1']
    #allocation5 [shape = 'u8[131072]{0}', space=vmem, size = 0x20000, scoped, tag = 'input window, operand 1']
    #allocation6 [shape = 's32[2]{0}', space=sflag, size = 0x8, scoped, tag = 'scoped memory for tpu_custom_call.1']
    #allocation7 [shape = 'u8[131072]{0}', space=vmem, size = 0x20000, scoped, tag = 'output window, operand 0']
    %7 = vsyncpa [#allocation3], 0
    %8 = vsyncpa [#allocation6], 0
    %s9 = scalar_lea.sflag [#allocation6], 1
    %10 = vsyncpa %s9, 0
    %11 = vsyncpa [#allocation4], 0
    %s12 = scalar_lea.sflag [#allocation4], 1
    %13 = vsyncpa %s12, 0
    loop: start=0, step=1, limit=4
    $region2: #{tpu_custom_call.1} parent=1 // loop_pre_header
      _
    $region3: #{tpu_custom_call.1} parent=1 // loop_header
      %s15 = sphi 0, %s19
      %p16 = scmp.ge.s32.totalorder %s15, 4
      %s23 = sphi 0, %s23
      %s25 = sphi 0, %s23
      %s26 = sphi 0, %s25
      %s40 = sphi 0, %s26
      %s46 = sphi 0, %s48
      %s49 = sphi 0, %s46
      %s50 = sphi 0, %s49
      %s66 = sphi 0, %s50
      %s72 = sphi 0, %s74
      %s75 = sphi 0, %s72
      %s76 = sphi 0, %s75
      %s92 = sphi 0, %s76
    $region4: #{tpu_custom_call.1} parent=1 // loop_header_branch
      %18 = sbr.rel (%p16) target = $region8
    $region5: #{tpu_custom_call.1} parent=1 // loop_body
      %s20 = ssub.s32 %s15, 1
      %s21 = ssub.s32 %s15, 2
      %s22 = sadd.s32 %s15, 1
      %s24 = sadd.s32 %s23, 1
      %p27 = scmp.eq.s32.totalorder %s15, 1
      %p28 = scmp.ne.s32.totalorder %s23, %s25
      %p29 = scmp.eq.s32.totalorder %s15, 0
      %p30 = por %p28, %p29
      %p31 = scmp.ne.s32.totalorder %s23, %s25
      %p32 = scmp.eq.s32.totalorder %s20, 1
      %p33 = por %p31, %p32
      %p34 = scmp.ne.s32.totalorder %s25, %s26
      %p35 = scmp.eq.s32.totalorder %s20, 0
      %p36 = por %p34, %p35
      %p37 = scmp.ne.s32.totalorder %s25, %s26
      %p38 = scmp.eq.s32.totalorder %s21, 1
      %p39 = por %p37, %p38
      %p41 = scmp.ne.s32.totalorder %s26, %s40
      %p42 = scmp.eq.s32.totalorder %s21, 0
      %p43 = por %p41, %p42
      %s44 = ssub.s32 %s15, %s22
      %p45 = scmp.eq.s32.totalorder %s44, 0
      %s47 = sadd.s32 %s46, 1
      %s48 = scalar_select %p45, %s46, %s47
      %p51 = pneg %p45
      %p52 = scmp.eq.s32.totalorder %s15, 1
      %p53 = por %p51, %p52
      %p54 = scmp.ne.s32.totalorder %s46, %s49
      %p55 = scmp.eq.s32.totalorder %s15, 0
      %p56 = por %p54, %p55
      %p57 = scmp.ne.s32.totalorder %s46, %s49
      %p58 = scmp.eq.s32.totalorder %s20, 1
      %p59 = por %p57, %p58
      %p60 = scmp.ne.s32.totalorder %s49, %s50
      %p61 = scmp.eq.s32.totalorder %s20, 0
      %p62 = por %p60, %p61
      %p63 = scmp.ne.s32.totalorder %s49, %s50
      %p64 = scmp.eq.s32.totalorder %s21, 1
      %p65 = por %p63, %p64
      %p67 = scmp.ne.s32.totalorder %s50, %s66
      %p68 = scmp.eq.s32.totalorder %s21, 0
      %p69 = por %p67, %p68
      %s70 = ssub.s32 %s15, %s22
      %p71 = scmp.eq.s32.totalorder %s70, 0
      %s73 = sadd.s32 %s72, 1
      %s74 = scalar_select %p71, %s72, %s73
      %p77 = pneg %p71
      %p78 = scmp.eq.s32.totalorder %s15, 1
      %p79 = por %p77, %p78
      %p80 = scmp.ne.s32.totalorder %s72, %s75
      %p81 = scmp.eq.s32.totalorder %s15, 0
      %p82 = por %p80, %p81
      %p83 = scmp.ne.s32.totalorder %s72, %s75
      %p84 = scmp.eq.s32.totalorder %s20, 1
      %p85 = por %p83, %p84
      %p86 = scmp.ne.s32.totalorder %s75, %s76
      %p87 = scmp.eq.s32.totalorder %s20, 0
      %p88 = por %p86, %p87
      %p89 = scmp.ne.s32.totalorder %s75, %s76
      %p90 = scmp.eq.s32.totalorder %s21, 1
      %p91 = por %p89, %p90
      %p93 = scmp.ne.s32.totalorder %s76, %s92
      %p94 = scmp.eq.s32.totalorder %s21, 0
      %p95 = por %p93, %p94
      %p96 = scmp.le.s32.totalorder 1, %s15
      %p97 = scmp.lt.s32.totalorder %s15, 3
      %p98 = pnand %p96, %p97
      %p99 = pneg %p98
      // Predicated region
      $region9: #{tpu_custom_call.1} parent=5 // pred_check
        _
      $region10: #{tpu_custom_call.1} parent=5 // pred_check_branch
        %101 = sbr.rel (%p98) target = $region12
      $region11: #{tpu_custom_call.1} parent=5 // pred_region
        %s102 = ssub.s32 %s15, 1
        // Predicated region
        $region13: #{tpu_custom_call.1} parent=11 // pred_check
          %p103 = pneg %p36
        $region14: #{tpu_custom_call.1} parent=11 // pred_check_branch
          %105 = sbr.rel (%p103) target = $region16
        $region15: #{tpu_custom_call.1} parent=11 // pred_region
          %s107 = ssub.s32 4352, 4352
          %108 = vsyncadd [#allocation3], %s107
          %s109 = sshll.u32 [#allocation2], 4
          %s110 = int_to_ptr.vmem [resolvable:$true] %s109
          %115 = dma.hbm_to_vmem [thread:$0]  %s0, 4352, %s110, [#allocation3], 128, 128, 8
        $region16: #{tpu_custom_call.1} parent=11 // pred_fallthru
          _
      $region12: #{tpu_custom_call.1} parent=5 // pred_fallthru
        _
      %p116 = scmp.lt.s32.totalorder %s15, 2
      // Predicated region
      $region17: #{tpu_custom_call.1} parent=5 // pred_check
        %p117 = pneg %p116
      $region18: #{tpu_custom_call.1} parent=5 // pred_check_branch
        %119 = sbr.rel (%p117) target = $region20
      $region19: #{tpu_custom_call.1} parent=5 // pred_region
        // Predicated region
        $region21: #{tpu_custom_call.1} parent=19 // pred_check
          %p120 = pneg %p56
        $region22: #{tpu_custom_call.1} parent=19 // pred_check_branch
          %122 = sbr.rel (%p120) target = $region24
        $region23: #{tpu_custom_call.1} parent=19 // pred_region
          %s123 = sand.u32 %s46, 1
          %s124 = scalar_lea.sflag [#allocation6], %s123
          %s125 = sand.u32 %s46, 1
          %s126 = smul.addr %s125, 128
          %s127 = scalar_lea.vmem [#allocation5], %s126
          %s128 = smul.u32 16, %s15
          %s130 = ssub.s32 2048, 2048
          %131 = vsyncadd %s124, %s130
          %s132 = smul.addr %s128, 128
          %s133 = scalar_lea.hbm %s1, %s132
          %s134 = sshll.u32 %s127, 4
          %s135 = int_to_ptr.vmem [resolvable:$true] %s134
          %140 = dma.hbm_to_vmem [thread:$0]  %s133, 2048, %s135, %s124, 128, 128, 8
        $region24: #{tpu_custom_call.1} parent=19 // pred_fallthru
          _
      $region20: #{tpu_custom_call.1} parent=5 // pred_fallthru
        _
      %p141 = scmp.le.s32.totalorder 1, %s15
      %p142 = scmp.lt.s32.totalorder %s15, 3
      %p143 = pnand %p141, %p142
      %p144 = pneg %p143
      // Predicated region
      $region25: #{tpu_custom_call.1} parent=5 // pred_check
        _
      $region26: #{tpu_custom_call.1} parent=5 // pred_check_branch
        %146 = sbr.rel (%p143) target = $region28
      $region27: #{tpu_custom_call.1} parent=5 // pred_region
        %s147 = ssub.s32 %s15, 1
        // Predicated region
        $region29: #{tpu_custom_call.1} parent=27 // pred_check
          %p148 = pneg %p36
        $region30: #{tpu_custom_call.1} parent=27 // pred_check_branch
          %150 = sbr.rel (%p148) target = $region32
        $region31: #{tpu_custom_call.1} parent=27 // pred_region
          %151 = dma.done [#allocation3], 4352
        $region32: #{tpu_custom_call.1} parent=27 // pred_fallthru
          _
        %s152 = sand.u32 %s49, 1
        %s153 = scalar_lea.sflag [#allocation6], %s152
        %s154 = sand.u32 %s49, 1
        %s155 = smul.addr %s154, 128
        %s156 = scalar_lea.vmem [#allocation5], %s155
        // Predicated region
        $region33: #{tpu_custom_call.1} parent=27 // pred_check
          %p157 = pneg %p62
        $region34: #{tpu_custom_call.1} parent=27 // pred_check_branch
          %159 = sbr.rel (%p157) target = $region36
        $region35: #{tpu_custom_call.1} parent=27 // pred_region
          %160 = dma.done %s153, 2048
        $region36: #{tpu_custom_call.1} parent=27 // pred_fallthru
          _
        %p161 = pneg %p36
        %p162 = pneg %p33
        %s163 = sand.u32 %s49, 1
        %s164 = scalar_lea.sflag [#allocation6], %s163
        %s165 = sand.u32 %s49, 1
        %s166 = smul.addr %s165, 128
        %s167 = scalar_lea.vmem [#allocation5], %s166
        %p168 = pneg %p62
        %p169 = pneg %p59
        %p170 = pneg %p88
        %p171 = pneg %p85
        %s172 = sand.u32 %s75, 1
        %s173 = scalar_lea.sflag [#allocation4], %s172
        %s174 = sand.u32 %s75, 1
        %s175 = smul.addr %s174, 128
        %s176 = scalar_lea.vmem [#allocation7], %s175
        %s177 = smul.u32 16, %s20
        %s178 = smul.u32 16, %s20
        %v179 = vld [vmem:[%s156] sm:$0xff]
        %v180 = vld [vmem:[%s156 + $0x8] sm:$0xff]
        %v181 = vld [vmem:[%s156 + $0x10] sm:$0xff]
        %v182 = vld [vmem:[%s156 + $0x18] sm:$0xff]
        %v183 = vld [vmem:[%s156 + $0x20] sm:$0xff]
        %v184 = vld [vmem:[%s156 + $0x28] sm:$0xff]
        %v185 = vld [vmem:[%s156 + $0x30] sm:$0xff]
        %v186 = vld [vmem:[%s156 + $0x38] sm:$0xff]
        %v187 = vld [vmem:[%s156 + $0x40] sm:$0xff]
        %v188 = vld [vmem:[%s156 + $0x48] sm:$0xff]
        %v189 = vld [vmem:[%s156 + $0x50] sm:$0xff]
        %v190 = vld [vmem:[%s156 + $0x58] sm:$0xff]
        %v191 = vld [vmem:[%s156 + $0x60] sm:$0xff]
        %v192 = vld [vmem:[%s156 + $0x68] sm:$0xff]
        %v193 = vld [vmem:[%s156 + $0x70] sm:$0xff]
        %v194 = vld [vmem:[%s156 + $0x78] sm:$0xff]
        %v195 = vld [vmem:[#allocation2] sm:$0xff]
        %v196 = vld [vmem:[#allocation2 + $0x8] sm:$0xff]
        %v197 = vld [vmem:[#allocation2 + $0x10] sm:$0xff]
        %v198 = vld [vmem:[#allocation2 + $0x18] sm:$0xff]
        %v199 = vld [vmem:[#allocation2 + $0x20] sm:$0xff]
        %v200 = vld [vmem:[#allocation2 + $0x28] sm:$0xff]
        %v201 = vld [vmem:[#allocation2 + $0x30] sm:$0xff]
        %v202 = vld [vmem:[#allocation2 + $0x38] sm:$0xff]
        %v203 = vld [vmem:[#allocation2 + $0x40] sm:$0xff]
        %v204 = vld [vmem:[#allocation2 + $0x48] sm:$0xff]
        %v205 = vld [vmem:[#allocation2 + $0x50] sm:$0xff]
        %v206 = vld [vmem:[#allocation2 + $0x58] sm:$0xff]
        %v207 = vld [vmem:[#allocation2 + $0x60] sm:$0xff]
        %v208 = vld [vmem:[#allocation2 + $0x68] sm:$0xff]
        %v209 = vld [vmem:[#allocation2 + $0x70] sm:$0xff]
        %v210 = vld [vmem:[#allocation2 + $0x78] sm:$0xff]
        %v211 = vld [vmem:[#allocation2 + $0x80] sm:$0x1]
        %v212 = vlaneseq
        %v213 = vshrl.u32 %v212, 7
        %v214 = vsub.s32 0, %v213
        %v215 = vrot.slane %v211, %v214
        %216 = vmatprep.subr.mxu0 0.0
        %217 = vmatpush1.msra.mxu0 %v195
        %218 = vmatprep.subr.mxu0 0.0
        %219 = vmatpush1.msra.mxu0 %v196
        %220 = vmatprep.subr.mxu0 0.0
        %221 = vmatpush1.msra.mxu0 %v197
        %222 = vmatprep.subr.mxu0 0.0
        %223 = vmatpush1.msra.mxu0 %v198
        %224 = vmatprep.subr.mxu0 0.0
        %225 = vmatpush1.msra.mxu0 %v199
        %226 = vmatprep.subr.mxu0 0.0
        %227 = vmatpush1.msra.mxu0 %v200
        %228 = vmatprep.subr.mxu0 0.0
        %229 = vmatpush1.msra.mxu0 %v201
        %230 = vmatprep.subr.mxu0 0.0
        %231 = vmatpush1.msra.mxu0 %v202
        %232 = vmatprep.subr.mxu0 0.0
        %233 = vmatpush1.msra.mxu0 %v203
        %234 = vmatprep.subr.mxu0 0.0
        %235 = vmatpush1.msra.mxu0 %v204
        %236 = vmatprep.subr.mxu0 0.0
        %237 = vmatpush1.msra.mxu0 %v205
        %238 = vmatprep.subr.mxu0 0.0
        %239 = vmatpush1.msra.mxu0 %v206
        %240 = vmatprep.subr.mxu0 0.0
        %241 = vmatpush1.msra.mxu0 %v207
        %242 = vmatprep.subr.mxu0 0.0
        %243 = vmatpush1.msra.mxu0 %v208
        %244 = vmatprep.subr.mxu0 0.0
        %245 = vmatpush1.msra.mxu0 %v209
        %246 = vmatprep.subr.mxu0 0.0
        %247 = vmatpush1.msra.mxu0 %v210
        %248 = vmatprep.subr.mxu0 0.0
        %249 = vmatpush1.msra.mxu0 0.0
        %250 = vmatprep.subr.mxu0 0.0
        %251 = vmatpush1.msra.mxu0 0.0
        %252 = vmatprep.subr.mxu0 0.0
        %253 = vmatpush1.msra.mxu0 0.0
        %254 = vmatprep.subr.mxu0 0.0
        %255 = vmatpush1.msra.mxu0 0.0
        %256 = vmatprep.subr.mxu0 0.0
        %257 = vmatpush1.msra.mxu0 0.0
        %258 = vmatprep.subr.mxu0 0.0
        %259 = vmatpush1.msra.mxu0 0.0
        %260 = vmatprep.subr.mxu0 0.0
        %261 = vmatpush1.msra.mxu0 0.0
        %262 = vmatprep.subr.mxu0 0.0
        %263 = vmatpush1.msra.mxu0 0.0
        %264 = vmatprep.subr.mxu0 0.0
        %265 = vmatpush1.msra.mxu0 0.0
        %266 = vmatprep.subr.mxu0 0.0
        %267 = vmatpush1.msra.mxu0 0.0
        %268 = vmatprep.subr.mxu0 0.0
        %269 = vmatpush1.msra.mxu0 0.0
        %270 = vmatprep.subr.mxu0 0.0
        %271 = vmatpush1.msra.mxu0 0.0
        %272 = vmatprep.subr.mxu0 0.0
        %273 = vmatpush1.msra.mxu0 0.0
        %274 = vmatprep.subr.mxu0 0.0
        %275 = vmatpush1.msra.mxu0 0.0
        %276 = vmatprep.subr.mxu0 0.0
        %277 = vmatpush1.msra.mxu0 0.0
        %278 = vmatprep.subr.mxu0 0.0
        %279 = vmatpush1.msra.mxu0 0.0
        %280 = vmatprep.mubr.f32.mxu0 0.0
        %281 = vmatmul.mubr.f32.gmra.mrb[0].mxu0 %v179
        %v282 = vpop.f32.mrb[0].mxu0
        %v283 = vadd.f32 %v215, %v282
        %v284 = vpop.f32.mrb[0].mxu0
        %285 = vmatprep.mubr.f32.mxu0 0.0
        %286 = vmatmul.mubr.f32.gmra.mrb[0].mxu0 %v180
        %v287 = vpop.f32.mrb[0].mxu0
        %v288 = vadd.f32 %v215, %v287
        %v289 = vpop.f32.mrb[0].mxu0
        %290 = vmatprep.mubr.f32.mxu0 0.0
        %291 = vmatmul.mubr.f32.gmra.mrb[0].mxu0 %v181
        %v292 = vpop.f32.mrb[0].mxu0
        %v293 = vadd.f32 %v215, %v292
        %v294 = vpop.f32.mrb[0].mxu0
        %295 = vmatprep.mubr.f32.mxu0 0.0
        %296 = vmatmul.mubr.f32.gmra.mrb[0].mxu0 %v182
        %v297 = vpop.f32.mrb[0].mxu0
        %v298 = vadd.f32 %v215, %v297
        %v299 = vpop.f32.mrb[0].mxu0
        %300 = vmatprep.mubr.f32.mxu0 0.0
        %301 = vmatmul.mubr.f32.gmra.mrb[0].mxu0 %v183
        %v302 = vpop.f32.mrb[0].mxu0
        %v303 = vadd.f32 %v215, %v302
        %v304 = vpop.f32.mrb[0].mxu0
        %305 = vmatprep.mubr.f32.mxu0 0.0
        %306 = vmatmul.mubr.f32.gmra.mrb[0].mxu0 %v184
        %v307 = vpop.f32.mrb[0].mxu0
        %v308 = vadd.f32 %v215, %v307
        %v309 = vpop.f32.mrb[0].mxu0
        %310 = vmatprep.mubr.f32.mxu0 0.0
        %311 = vmatmul.mubr.f32.gmra.mrb[0].mxu0 %v185
        %v312 = vpop.f32.mrb[0].mxu0
        %v313 = vadd.f32 %v215, %v312
        %v314 = vpop.f32.mrb[0].mxu0
        %315 = vmatprep.mubr.f32.mxu0 0.0
        %316 = vmatmul.mubr.f32.gmra.mrb[0].mxu0 %v186
        %v317 = vpop.f32.mrb[0].mxu0
        %v318 = vadd.f32 %v215, %v317
        %v319 = vpop.f32.mrb[0].mxu0
        %320 = vmatprep.mubr.f32.mxu0 0.0
        %321 = vmatmul.mubr.f32.gmra.mrb[0].mxu0 %v187
        %v322 = vpop.f32.mrb[0].mxu0
        %v323 = vadd.f32 %v215, %v322
        %v324 = vpop.f32.mrb[0].mxu0
        %325 = vmatprep.mubr.f32.mxu0 0.0
        %326 = vmatmul.mubr.f32.gmra.mrb[0].mxu0 %v188
        %v327 = vpop.f32.mrb[0].mxu0
        %v328 = vadd.f32 %v215, %v327
        %v329 = vpop.f32.mrb[0].mxu0
        %330 = vmatprep.mubr.f32.mxu0 0.0
        %331 = vmatmul.mubr.f32.gmra.mrb[0].mxu0 %v189
        %v332 = vpop.f32.mrb[0].mxu0
        %v333 = vadd.f32 %v215, %v332
        %v334 = vpop.f32.mrb[0].mxu0
        %335 = vmatprep.mubr.f32.mxu0 0.0
        %336 = vmatmul.mubr.f32.gmra.mrb[0].mxu0 %v190
        %v337 = vpop.f32.mrb[0].mxu0
        %v338 = vadd.f32 %v215, %v337
        %v339 = vpop.f32.mrb[0].mxu0
        %340 = vmatprep.mubr.f32.mxu0 0.0
        %341 = vmatmul.mubr.f32.gmra.mrb[0].mxu0 %v191
        %v342 = vpop.f32.mrb[0].mxu0
        %v343 = vadd.f32 %v215, %v342
        %v344 = vpop.f32.mrb[0].mxu0
        %345 = vmatprep.mubr.f32.mxu0 0.0
        %346 = vmatmul.mubr.f32.gmra.mrb[0].mxu0 %v192
        %v347 = vpop.f32.mrb[0].mxu0
        %v348 = vadd.f32 %v215, %v347
        %v349 = vpop.f32.mrb[0].mxu0
        %350 = vmatprep.mubr.f32.mxu0 0.0
        %351 = vmatmul.mubr.f32.gmra.mrb[0].mxu0 %v193
        %v352 = vpop.f32.mrb[0].mxu0
        %v353 = vadd.f32 %v215, %v352
        %v354 = vpop.f32.mrb[0].mxu0
        %355 = vmatprep.mubr.f32.mxu0 0.0
        %356 = vmatmul.mubr.f32.gmra.mrb[0].mxu0 %v194
        %v357 = vpop.f32.mrb[0].mxu0
        %v358 = vadd.f32 %v215, %v357
        %v359 = vpop.f32.mrb[0].mxu0
        %360 = vdwg.mxu0
        %vm361 = vcmp.gt.f32.partialorder %v283, 0.0
        %vm362 = vcmp.gt.f32.partialorder %v288, 0.0
        %vm363 = vcmp.gt.f32.partialorder %v293, 0.0
        %vm364 = vcmp.gt.f32.partialorder %v298, 0.0
        %vm365 = vcmp.gt.f32.partialorder %v303, 0.0
        %vm366 = vcmp.gt.f32.partialorder %v308, 0.0
        %vm367 = vcmp.gt.f32.partialorder %v313, 0.0
        %vm368 = vcmp.gt.f32.partialorder %v318, 0.0
        %vm369 = vcmp.gt.f32.partialorder %v323, 0.0
        %vm370 = vcmp.gt.f32.partialorder %v328, 0.0
        %vm371 = vcmp.gt.f32.partialorder %v333, 0.0
        %vm372 = vcmp.gt.f32.partialorder %v338, 0.0
        %vm373 = vcmp.gt.f32.partialorder %v343, 0.0
        %vm374 = vcmp.gt.f32.partialorder %v348, 0.0
        %vm375 = vcmp.gt.f32.partialorder %v353, 0.0
        %vm376 = vcmp.gt.f32.partialorder %v358, 0.0
        %v377 = vmul.f32 %v283, 0.01
        %v378 = vmul.f32 %v288, 0.01
        %v379 = vmul.f32 %v293, 0.01
        %v380 = vmul.f32 %v298, 0.01
        %v381 = vmul.f32 %v303, 0.01
        %v382 = vmul.f32 %v308, 0.01
        %v383 = vmul.f32 %v313, 0.01
        %v384 = vmul.f32 %v318, 0.01
        %v385 = vmul.f32 %v323, 0.01
        %v386 = vmul.f32 %v328, 0.01
        %v387 = vmul.f32 %v333, 0.01
        %v388 = vmul.f32 %v338, 0.01
        %v389 = vmul.f32 %v343, 0.01
        %v390 = vmul.f32 %v348, 0.01
        %v391 = vmul.f32 %v353, 0.01
        %v392 = vmul.f32 %v358, 0.01
        %v393 = vsel %vm361, %v283, %v377
        %v394 = vsel %vm362, %v288, %v378
        %v395 = vsel %vm363, %v293, %v379
        %v396 = vsel %vm364, %v298, %v380
        %v397 = vsel %vm365, %v303, %v381
        %v398 = vsel %vm366, %v308, %v382
        %v399 = vsel %vm367, %v313, %v383
        %v400 = vsel %vm368, %v318, %v384
        %v401 = vsel %vm369, %v323, %v385
        %v402 = vsel %vm370, %v328, %v386
        %v403 = vsel %vm371, %v333, %v387
        %v404 = vsel %vm372, %v338, %v388
        %v405 = vsel %vm373, %v343, %v389
        %v406 = vsel %vm374, %v348, %v390
        %v407 = vsel %vm375, %v353, %v391
        %v408 = vsel %vm376, %v358, %v392
        %v409 = vld [vmem:[#allocation2 + $0x88] sm:$0xff]
        %v410 = vld [vmem:[#allocation2 + $0x90] sm:$0xff]
        %v411 = vld [vmem:[#allocation2 + $0x98] sm:$0xff]
        %v412 = vld [vmem:[#allocation2 + $0xa0] sm:$0xff]
        %v413 = vld [vmem:[#allocation2 + $0xa8] sm:$0xff]
        %v414 = vld [vmem:[#allocation2 + $0xb0] sm:$0xff]
        %v415 = vld [vmem:[#allocation2 + $0xb8] sm:$0xff]
        %v416 = vld [vmem:[#allocation2 + $0xc0] sm:$0xff]
        %v417 = vld [vmem:[#allocation2 + $0xc8] sm:$0xff]
        %v418 = vld [vmem:[#allocation2 + $0xd0] sm:$0xff]
        %v419 = vld [vmem:[#allocation2 + $0xd8] sm:$0xff]
        %v420 = vld [vmem:[#allocation2 + $0xe0] sm:$0xff]
        %v421 = vld [vmem:[#allocation2 + $0xe8] sm:$0xff]
        %v422 = vld [vmem:[#allocation2 + $0xf0] sm:$0xff]
        %v423 = vld [vmem:[#allocation2 + $0xf8] sm:$0xff]
        %v424 = vld [vmem:[#allocation2 + $0x100] sm:$0xff]
        %v425 = vld [vmem:[#allocation2 + $0x108] sm:$0x1]
        %v426 = vlaneseq
        %v427 = vshrl.u32 %v426, 7
        %v428 = vsub.s32 0, %v427
        %v429 = vrot.slane %v425, %v428
        %430 = vmatprep.subr.mxu0 0.0
        %431 = vmatpush1.msra.mxu0 %v409
        %432 = vmatprep.subr.mxu0 0.0
        %433 = vmatpush1.msra.mxu0 %v410
        %434 = vmatprep.subr.mxu0 0.0
        %435 = vmatpush1.msra.mxu0 %v411
        %436 = vmatprep.subr.mxu0 0.0
        %437 = vmatpush1.msra.mxu0 %v412
        %438 = vmatprep.subr.mxu0 0.0
        %439 = vmatpush1.msra.mxu0 %v413
        %440 = vmatprep.subr.mxu0 0.0
        %441 = vmatpush1.msra.mxu0 %v414
        %442 = vmatprep.subr.mxu0 0.0
        %443 = vmatpush1.msra.mxu0 %v415
        %444 = vmatprep.subr.mxu0 0.0
        %445 = vmatpush1.msra.mxu0 %v416
        %446 = vmatprep.subr.mxu0 0.0
        %447 = vmatpush1.msra.mxu0 %v417
        %448 = vmatprep.subr.mxu0 0.0
        %449 = vmatpush1.msra.mxu0 %v418
        %450 = vmatprep.subr.mxu0 0.0
        %451 = vmatpush1.msra.mxu0 %v419
        %452 = vmatprep.subr.mxu0 0.0
        %453 = vmatpush1.msra.mxu0 %v420
        %454 = vmatprep.subr.mxu0 0.0
        %455 = vmatpush1.msra.mxu0 %v421
        %456 = vmatprep.subr.mxu0 0.0
        %457 = vmatpush1.msra.mxu0 %v422
        %458 = vmatprep.subr.mxu0 0.0
        %459 = vmatpush1.msra.mxu0 %v423
        %460 = vmatprep.subr.mxu0 0.0
        %461 = vmatpush1.msra.mxu0 %v424
        %462 = vmatprep.subr.mxu0 0.0
        %463 = vmatpush1.msra.mxu0 0.0
        %464 = vmatprep.subr.mxu0 0.0
        %465 = vmatpush1.msra.mxu0 0.0
        %466 = vmatprep.subr.mxu0 0.0
        %467 = vmatpush1.msra.mxu0 0.0
        %468 = vmatprep.subr.mxu0 0.0
        %469 = vmatpush1.msra.mxu0 0.0
        %470 = vmatprep.subr.mxu0 0.0
        %471 = vmatpush1.msra.mxu0 0.0
        %472 = vmatprep.subr.mxu0 0.0
        %473 = vmatpush1.msra.mxu0 0.0
        %474 = vmatprep.subr.mxu0 0.0
        %475 = vmatpush1.msra.mxu0 0.0
        %476 = vmatprep.subr.mxu0 0.0
        %477 = vmatpush1.msra.mxu0 0.0
        %478 = vmatprep.subr.mxu0 0.0
        %479 = vmatpush1.msra.mxu0 0.0
        %480 = vmatprep.subr.mxu0 0.0
        %481 = vmatpush1.msra.mxu0 0.0
        %482 = vmatprep.subr.mxu0 0.0
        %483 = vmatpush1.msra.mxu0 0.0
        %484 = vmatprep.subr.mxu0 0.0
        %485 = vmatpush1.msra.mxu0 0.0
        %486 = vmatprep.subr.mxu0 0.0
        %487 = vmatpush1.msra.mxu0 0.0
        %488 = vmatprep.subr.mxu0 0.0
        %489 = vmatpush1.msra.mxu0 0.0
        %490 = vmatprep.subr.mxu0 0.0
        %491 = vmatpush1.msra.mxu0 0.0
        %492 = vmatprep.subr.mxu0 0.0
        %493 = vmatpush1.msra.mxu0 0.0
        %494 = vmatprep.mubr.f32.mxu0 0.0
        %495 = vmatmul.mubr.f32.gmra.mrb[0].mxu0 %v393
        %v496 = vpop.f32.mrb[0].mxu0
        %v497 = vadd.f32 %v429, %v496
        %v498 = vpop.f32.mrb[0].mxu0
        %499 = vmatprep.mubr.f32.mxu0 0.0
        %500 = vmatmul.mubr.f32.gmra.mrb[0].mxu0 %v394
        %v501 = vpop.f32.mrb[0].mxu0
        %v502 = vadd.f32 %v429, %v501
        %v503 = vpop.f32.mrb[0].mxu0
        %504 = vmatprep.mubr.f32.mxu0 0.0
        %505 = vmatmul.mubr.f32.gmra.mrb[0].mxu0 %v395
        %v506 = vpop.f32.mrb[0].mxu0
        %v507 = vadd.f32 %v429, %v506
        %v508 = vpop.f32.mrb[0].mxu0
        %509 = vmatprep.mubr.f32.mxu0 0.0
        %510 = vmatmul.mubr.f32.gmra.mrb[0].mxu0 %v396
        %v511 = vpop.f32.mrb[0].mxu0
        %v512 = vadd.f32 %v429, %v511
        %v513 = vpop.f32.mrb[0].mxu0
        %514 = vmatprep.mubr.f32.mxu0 0.0
        %515 = vmatmul.mubr.f32.gmra.mrb[0].mxu0 %v397
        %v516 = vpop.f32.mrb[0].mxu0
        %v517 = vadd.f32 %v429, %v516
        %v518 = vpop.f32.mrb[0].mxu0
        %519 = vmatprep.mubr.f32.mxu0 0.0
        %520 = vmatmul.mubr.f32.gmra.mrb[0].mxu0 %v398
        %v521 = vpop.f32.mrb[0].mxu0
        %v522 = vadd.f32 %v429, %v521
        %v523 = vpop.f32.mrb[0].mxu0
        %524 = vmatprep.mubr.f32.mxu0 0.0
        %525 = vmatmul.mubr.f32.gmra.mrb[0].mxu0 %v399
        %v526 = vpop.f32.mrb[0].mxu0
        %v527 = vadd.f32 %v429, %v526
        %v528 = vpop.f32.mrb[0].mxu0
        %529 = vmatprep.mubr.f32.mxu0 0.0
        %530 = vmatmul.mubr.f32.gmra.mrb[0].mxu0 %v400
        %v531 = vpop.f32.mrb[0].mxu0
        %v532 = vadd.f32 %v429, %v531
        %v533 = vpop.f32.mrb[0].mxu0
        %534 = vmatprep.mubr.f32.mxu0 0.0
        %535 = vmatmul.mubr.f32.gmra.mrb[0].mxu0 %v401
        %v536 = vpop.f32.mrb[0].mxu0
        %v537 = vadd.f32 %v429, %v536
        %v538 = vpop.f32.mrb[0].mxu0
        %539 = vmatprep.mubr.f32.mxu0 0.0
        %540 = vmatmul.mubr.f32.gmra.mrb[0].mxu0 %v402
        %v541 = vpop.f32.mrb[0].mxu0
        %v542 = vadd.f32 %v429, %v541
        %v543 = vpop.f32.mrb[0].mxu0
        %544 = vmatprep.mubr.f32.mxu0 0.0
        %545 = vmatmul.mubr.f32.gmra.mrb[0].mxu0 %v403
        %v546 = vpop.f32.mrb[0].mxu0
        %v547 = vadd.f32 %v429, %v546
        %v548 = vpop.f32.mrb[0].mxu0
        %549 = vmatprep.mubr.f32.mxu0 0.0
        %550 = vmatmul.mubr.f32.gmra.mrb[0].mxu0 %v404
        %v551 = vpop.f32.mrb[0].mxu0
        %v552 = vadd.f32 %v429, %v551
        %v553 = vpop.f32.mrb[0].mxu0
        %554 = vmatprep.mubr.f32.mxu0 0.0
        %555 = vmatmul.mubr.f32.gmra.mrb[0].mxu0 %v405
        %v556 = vpop.f32.mrb[0].mxu0
        %v557 = vadd.f32 %v429, %v556
        %v558 = vpop.f32.mrb[0].mxu0
        %559 = vmatprep.mubr.f32.mxu0 0.0
        %560 = vmatmul.mubr.f32.gmra.mrb[0].mxu0 %v406
        %v561 = vpop.f32.mrb[0].mxu0
        %v562 = vadd.f32 %v429, %v561
        %v563 = vpop.f32.mrb[0].mxu0
        %564 = vmatprep.mubr.f32.mxu0 0.0
        %565 = vmatmul.mubr.f32.gmra.mrb[0].mxu0 %v407
        %v566 = vpop.f32.mrb[0].mxu0
        %v567 = vadd.f32 %v429, %v566
        %v568 = vpop.f32.mrb[0].mxu0
        %569 = vmatprep.mubr.f32.mxu0 0.0
        %570 = vmatmul.mubr.f32.gmra.mrb[0].mxu0 %v408
        %v571 = vpop.f32.mrb[0].mxu0
        %v572 = vadd.f32 %v429, %v571
        %v573 = vpop.f32.mrb[0].mxu0
        %574 = vdwg.mxu0
        %575 = vst [vmem:[%s176] sm:$0xff] %v497
        %576 = vst [vmem:[%s176 + $0x8] sm:$0xff] %v502
        %577 = vst [vmem:[%s176 + $0x10] sm:$0xff] %v507
        %578 = vst [vmem:[%s176 + $0x18] sm:$0xff] %v512
        %579 = vst [vmem:[%s176 + $0x20] sm:$0xff] %v517
        %580 = vst [vmem:[%s176 + $0x28] sm:$0xff] %v522
        %581 = vst [vmem:[%s176 + $0x30] sm:$0xff] %v527
        %582 = vst [vmem:[%s176 + $0x38] sm:$0xff] %v532
        %583 = vst [vmem:[%s176 + $0x40] sm:$0xff] %v537
        %584 = vst [vmem:[%s176 + $0x48] sm:$0xff] %v542
        %585 = vst [vmem:[%s176 + $0x50] sm:$0xff] %v547
        %586 = vst [vmem:[%s176 + $0x58] sm:$0xff] %v552
        %587 = vst [vmem:[%s176 + $0x60] sm:$0xff] %v557
        %588 = vst [vmem:[%s176 + $0x68] sm:$0xff] %v562
        %589 = vst [vmem:[%s176 + $0x70] sm:$0xff] %v567
        %590 = vst [vmem:[%s176 + $0x78] sm:$0xff] %v572
        %s591 = sand.u32 %s75, 1
        %s592 = scalar_lea.sflag [#allocation4], %s591
        %s593 = sand.u32 %s75, 1
        %s594 = smul.addr %s593, 128
        %s595 = scalar_lea.vmem [#allocation7], %s594
        // Predicated region
        $region37: #{tpu_custom_call.1} parent=27 // pred_check
          %p596 = pneg %p85
        $region38: #{tpu_custom_call.1} parent=27 // pred_check_branch
          %598 = sbr.rel (%p596) target = $region40
        $region39: #{tpu_custom_call.1} parent=27 // pred_region
          %s599 = smul.u32 16, %s20
          %s601 = ssub.s32 2048, 2048
          %602 = vsyncadd %s592, %s601
          %s603 = smul.addr %s599, 128
          %s604 = scalar_lea.hbm %s2, %s603
          %s605 = sshll.u32 %s595, 4
          %s606 = int_to_ptr.vmem [resolvable:$true] %s605
          %611 = dma.vmem_to_hbm [thread:$0]  %s606, 2048, %s604, %s592, 128, 128, 8
        $region40: #{tpu_custom_call.1} parent=27 // pred_fallthru
          _
      $region28: #{tpu_custom_call.1} parent=5 // pred_fallthru
        _
      %p612 = scmp.le.s32.totalorder 2, %s15
      // Predicated region
      $region41: #{tpu_custom_call.1} parent=5 // pred_check
        %p613 = pneg %p612
      $region42: #{tpu_custom_call.1} parent=5 // pred_check_branch
        %615 = sbr.rel (%p613) target = $region44
      $region43: #{tpu_custom_call.1} parent=5 // pred_region
        %s616 = ssub.s32 %s15, 2
        // Predicated region
        $region45: #{tpu_custom_call.1} parent=43 // pred_check
          %p617 = pneg %p91
        $region46: #{tpu_custom_call.1} parent=43 // pred_check_branch
          %619 = sbr.rel (%p617) target = $region48
        $region47: #{tpu_custom_call.1} parent=43 // pred_region
          %s620 = sand.u32 %s76, 1
          %s621 = scalar_lea.sflag [#allocation4], %s620
          %s622 = sand.u32 %s76, 1
          %s623 = smul.addr %s622, 128
          %s624 = scalar_lea.vmem [#allocation7], %s623
          %625 = dma.done %s621, 2048
        $region48: #{tpu_custom_call.1} parent=43 // pred_fallthru
          _
      $region44: #{tpu_custom_call.1} parent=5 // pred_fallthru
        _
    $region6: #{tpu_custom_call.1} parent=1 // loop_footer
      %s19 = sadd.s32 1, %s15
    $region7: #{tpu_custom_call.1} parent=1 // loop_footer_branch
      %14 = sbr.rel target = $region3
    $region8: #{tpu_custom_call.1} parent=1 // loop_exit
      _
    %626 = vsyncpa [#allocation3], 1
    %s627 = scalar_lea.sflag [#allocation3], 1
    %628 = vsyncpa %s627, 1
    %629 = vsyncpa [#allocation6], 1
    %s630 = scalar_lea.sflag [#allocation6], 1
    %631 = vsyncpa %s630, 1
    %632 = vsyncpa [#allocation4], 1
    %s633 = scalar_lea.sflag [#allocation4], 1
    %634 = vsyncpa %s633, 1

</llo_original>
